<compile_context>
chip_gen: v5e
topology: v5e:2x2
jax: 0.10.0
libtpu: 0.0.40
codegen_flags: <defaults>
</compile_context>

<pallas_src>
import math
import functools

import jax
import jax.numpy as jnp
import numpy as np
from jax.experimental import pallas as pl
from jax.experimental.pallas import tpu as pltpu

# ---------------- config (small, consistent with the T5Config fields used) ----------------
BATCH = 2
SEQ = 8
D_MODEL = 32
N_HEADS = 4
D_KV = 8
INNER = N_HEADS * D_KV          # 32
NUM_BUCKETS = 32
MAX_DISTANCE = 128
LN_EPS = 1e-6
IS_DECODER = False              # bidirectional relative-position buckets


# ---------------- Pallas kernel: whole problem in one gridless invocation ----------------
def t5_self_attn_kernel(x_ref, lnw_ref, wqkv_ref, wo_ref, bias_ref, o_ref,
                        *, n_heads, d_kv, eps):
    B, S, D = x_ref.shape
    H, Dk = n_heads, d_kv
    inner = H * Dk

    x = x_ref[...].astype(jnp.float32)                          # (B, S, D)

    # --- T5 LayerNorm (RMS, no mean subtraction, fp32) ---
    var = jnp.mean(x * x, axis=-1, keepdims=True)
    normed = x * jax.lax.rsqrt(var + eps) * lnw_ref[...]         # (B, S, D)

    # --- fused q/k/v projection: ONE 2-D MXU matmul (B*S, D) @ (D, 3*inner) ---
    normed_flat = normed.reshape(B * S, D)                       # (16, 32)  leading-dim merge
    qkv = jnp.dot(normed_flat, wqkv_ref[...],
                  preferred_element_type=jnp.float32)            # (B*S, 3*inner) = (16, 96)

    bias = bias_ref[...]                                         # (H, S, S), loaded once

    # --- per-head attention: static lane slices of qkv, B-batched matmuls ---
    # (lane slices + leading-dim reshapes only; no 4-D transposes / lane-splitting reshapes)
    ctx_heads = []
    for h in range(H):
        q_h = qkv[:, h * Dk:(h + 1) * Dk].reshape(B, S, Dk)
        k_h = qkv[:, inner + h * Dk: inner + (h + 1) * Dk].reshape(B, S, Dk)
        v_h = qkv[:, 2 * inner + h * Dk: 2 * inner + (h + 1) * Dk].reshape(B, S, Dk)

        # scores + relative-position bias (no 1/sqrt(d_kv) scaling, T5-style);
        # bias[h] is (S, S) and broadcasts over the batch dim (no BH materialization).
        s = jnp.einsum('bqd,bkd->bqk', q_h, k_h,
                       preferred_element_type=jnp.float32) + bias[h]   # (B, S, S)

        # fp32 softmax; reciprocal on the EUP (vrcp) + one Newton step (~1e-8 rel error)
        m = jnp.max(s, axis=-1, keepdims=True)
        e = jnp.exp(s - m)
        denom = jnp.sum(e, axis=-1, keepdims=True)
        r = pl.reciprocal(denom, approx=True)
        r = r * (2.0 - denom * r)                                # Newton refinement
        p = e * r

        ctx_heads.append(jnp.einsum('bqk,bkd->bqd', p, v_h,
                                    preferred_element_type=jnp.float32))  # (B, S, Dk)

    # --- output projection: head-concat along the contraction dim, ONE 2-D matmul ---
    ctx_flat = jnp.concatenate(ctx_heads, axis=-1).reshape(B * S, inner)  # (B*S, inner)
    attn_out = jnp.dot(ctx_flat, wo_ref[...],
                       preferred_element_type=jnp.float32).reshape(B, S, D)

    # --- residual (dropout is identity in eval mode); single whole-block store ---
    o_ref[...] = (x + attn_out).astype(o_ref.dtype)


def t5_layer_self_attention(x, ln_weight, wq, wk, wv, wo, rel_emb):
    """x: (B,S,D); wq/wk/wv: (inner, d_model) and wo: (d_model, inner) in PyTorch Linear layout;
    ln_weight: (d_model,); rel_emb: (num_buckets, n_heads)."""
    B, S, D = x.shape
    H, Dk = N_HEADS, D_KV

    # --- glue JAX (layout plumbing + bias precompute, outside the kernel) ---
    pos_bias = compute_position_bias(rel_emb, S, S)                     # (H, S, S)
    # Fused QKV weight, columns = [q(h,d) | k(h,d) | v(h,d)]  ->  (D, 3*inner)
    wqkv = jnp.concatenate([wq.T, wk.T, wv.T], axis=1)                  # (32, 96)
    wo_t = wo.T                                                         # (inner, D), rows (h,d)
    ln_w2 = ln_weight.reshape(1, D)

    kernel = functools.partial(t5_self_attn_kernel, n_heads=H, d_kv=Dk, eps=LN_EPS)

    # Advisory cost estimate so XLA schedules around this tiny custom call.
    flops = (2 * (B * S) * D * (3 * INNER)            # fused qkv projection
             + 2 * 2 * B * H * S * S * Dk             # scores + probs@v
             + 2 * (B * S) * INNER * D)               # output projection
    transcendentals = B * H * S * S + B * S + B * H * S      # exp + rsqrt + rcp
    bytes_accessed = 4 * (2 * x.size + wqkv.size + wo_t.size + pos_bias.size + ln_w2.size)

    # No grid: one invocation, every operand is a single whole-array VMEM block.
    return pl.pallas_call(
        kernel,
        out_shape=jax.ShapeDtypeStruct((B, S, D), x.dtype),
        in_specs=[pl.BlockSpec(memory_space=pltpu.MemorySpace.VMEM)] * 5,
        out_specs=pl.BlockSpec(memory_space=pltpu.MemorySpace.VMEM),
        cost_estimate=pl.CostEstimate(flops=flops,
                                      transcendentals=transcendentals,
                                      bytes_accessed=bytes_accessed),
    )(x, ln_w2, wqkv, wo_t, pos_bias)


# ---------------- relative position bias (glue JAX: integer bucketing + embedding gather) ----
def _relative_position_bucket(relative_position, bidirectional, num_buckets, max_distance):
    relative_buckets = jnp.zeros_like(relative_position)
    if bidirectional:
        num_buckets //= 2
        relative_buckets = relative_buckets + (relative_position > 0).astype(jnp.int32) * num_buckets
        relative_position = jnp.abs(relative_position)
    else:
        relative_position = -jnp.minimum(relative_position, 0)
    max_exact = num_buckets // 2
    is_small = relative_position < max_exact
    # Guard log against 0: those positions are masked by `is_small` below, matching the
    # PyTorch implementation's effective behavior while avoiding -inf -> int casts.
    rel_pos_safe = jnp.maximum(relative_position, 1).astype(jnp.float32)
    rel_if_large = max_exact + (
        jnp.log(rel_pos_safe / max_exact)
        / math.log(max_distance / max_exact)
        * (num_buckets - max_exact)
    ).astype(jnp.int32)
    rel_if_large = jnp.minimum(rel_if_large, num_buckets - 1)
    relative_buckets = relative_buckets + jnp.where(is_small, relative_position, rel_if_large)
    return relative_buckets


def compute_position_bias(rel_emb, q_len, k_len):
    """rel_emb: (num_buckets, n_heads). Returns (n_heads, q_len, k_len)."""
    ctx_pos = jnp.arange(q_len, dtype=jnp.int32)[:, None]
    mem_pos = jnp.arange(k_len, dtype=jnp.int32)[None, :]
    rel_pos = mem_pos - ctx_pos
    buckets = _relative_position_bucket(rel_pos, bidirectional=not IS_DECODER,
                                        num_buckets=NUM_BUCKETS, max_distance=MAX_DISTANCE)
    values = rel_emb[buckets]                       # (q_len, k_len, n_heads)
    return jnp.transpose(values, (2, 0, 1))         # (n_heads, q_len, k_len)


# ---------------- pure-JAX reference (for correctness check) ----------------
def reference(x, ln_w, wq, wk, wv, wo, pos_bias):
    xf = x.astype(jnp.float32)
    var = jnp.mean(xf * xf, axis=-1, keepdims=True)
    normed = xf * jax.lax.rsqrt(var + LN_EPS) * ln_w
    q = normed @ wq.T
    k = normed @ wk.T
    v = normed @ wv.T
    B, S, _ = x.shape
    qh = q.reshape(B, S, N_HEADS, D_KV).transpose(0, 2, 1, 3)
    kh = k.reshape(B, S, N_HEADS, D_KV).transpose(0, 2, 1, 3)
    vh = v.reshape(B, S, N_HEADS, D_KV).transpose(0, 2, 1, 3)
    scores = jnp.einsum('bhqd,bhkd->bhqk', qh, kh) + pos_bias[None]
    probs = jax.nn.softmax(scores, axis=-1)
    ctx = jnp.einsum('bhqk,bhkd->bhqd', probs, vh).transpose(0, 2, 1, 3).reshape(B, S, INNER)
    return x + ctx @ wo.T


# ---------------- main ----------------
if __name__ == "__main__":
    key = jax.random.PRNGKey(0)
    k_x, k_q, k_k, k_v, k_o, k_rb, k_ln = jax.random.split(key, 7)

    x = jax.random.normal(k_x, (BATCH, SEQ, D_MODEL), dtype=jnp.float32)

    # Deterministic parameters in PyTorch layouts (Linear weight = (out, in)).
    scale = 0.05
    wq = scale * jax.random.normal(k_q, (INNER, D_MODEL), dtype=jnp.float32)
    wk = scale * jax.random.normal(k_k, (INNER, D_MODEL), dtype=jnp.float32)
    wv = scale * jax.random.normal(k_v, (INNER, D_MODEL), dtype=jnp.float32)
    wo = scale * jax.random.normal(k_o, (D_MODEL, INNER), dtype=jnp.float32)
    ln_w = 1.0 + 0.1 * jax.random.normal(k_ln, (D_MODEL,), dtype=jnp.float32)   # T5LayerNorm weight
    rel_emb = scale * jax.random.normal(k_rb, (NUM_BUCKETS, N_HEADS), dtype=jnp.float32)

    # TODO(synk): attention_mask / past_key_value / layer_head_mask / training dropout paths
    # are not exercised (module defaults: mask=None, past_key_value=None, eval-mode dropout).

    out = t5_layer_self_attention(x, ln_w, wq, wk, wv, wo, rel_emb)
    out = jax.block_until_ready(out)

    ref = reference(x, ln_w, wq, wk, wv, wo, compute_position_bias(rel_emb, SEQ, SEQ))
    np.testing.assert_allclose(np.asarray(out), np.asarray(ref), rtol=1e-5, atol=1e-5)

    print("KERNEL_OK")
</pallas_src>

<mosaic_0001>
module attributes {stable_mosaic.version = 11 : i64} {
  func.func @t5_self_attn_kernel(%arg0: memref<2x8x32xf32, #tpu.memory_space<vmem>>, %arg1: memref<1x32xf32, #tpu.memory_space<vmem>>, %arg2: memref<32x96xf32, #tpu.memory_space<vmem>>, %arg3: memref<32x32xf32, #tpu.memory_space<vmem>>, %arg4: memref<4x8x8xf32, #tpu.memory_space<vmem>>, %arg5: memref<2x8x32xf32, #tpu.memory_space<vmem>>) attributes {dimension_semantics = [], scalar_prefetch = 0 : i64, scratch_operands = 0 : i64, tpu.core_type = #tpu.core_type<tc>} {
    %c0 = arith.constant 0 : index
    %c0_0 = arith.constant 0 : index
    %c0_1 = arith.constant 0 : index
    %0 = vector.load %arg0[%c0, %c0_0, %c0_1] : memref<2x8x32xf32, #tpu.memory_space<vmem>>, vector<2x8x32xf32>
    %1 = arith.mulf %0, %0 : vector<2x8x32xf32>
    %cst = arith.constant dense<0.000000e+00> : vector<2x8xf32>
    %2 = vector.multi_reduction <add>, %1, %cst [2] : vector<2x8x32xf32> to vector<2x8xf32>
    %3 = vector.shape_cast %2 : vector<2x8xf32> to vector<2x8x1xf32>
    %cst_2 = arith.constant 3.200000e+01 : f32
    %4 = vector.broadcast %cst_2 : f32 to vector<2x8x1xf32>
    %5 = arith.divf %3, %4 : vector<2x8x1xf32>
    %cst_3 = arith.constant 9.99999997E-7 : f32
    %6 = vector.broadcast %cst_3 : f32 to vector<2x8x1xf32>
    %7 = arith.addf %5, %6 : vector<2x8x1xf32>
    %8 = math.rsqrt %7 : vector<2x8x1xf32>
    %9 = vector.broadcast %8 : vector<2x8x1xf32> to vector<2x8x32xf32>
    %10 = arith.mulf %0, %9 : vector<2x8x32xf32>
    %c0_4 = arith.constant 0 : index
    %c0_5 = arith.constant 0 : index
    %11 = vector.load %arg1[%c0_4, %c0_5] : memref<1x32xf32, #tpu.memory_space<vmem>>, vector<1x32xf32>
    %12 = vector.shape_cast %11 : vector<1x32xf32> to vector<1x1x32xf32>
    %13 = vector.broadcast %12 : vector<1x1x32xf32> to vector<2x8x32xf32>
    %14 = arith.mulf %10, %13 : vector<2x8x32xf32>
    %15 = vector.shape_cast %14 : vector<2x8x32xf32> to vector<16x32xf32>
    %c0_6 = arith.constant 0 : index
    %c0_7 = arith.constant 0 : index
    %16 = vector.load %arg2[%c0_6, %c0_7] : memref<32x96xf32, #tpu.memory_space<vmem>>, vector<32x96xf32>
    %cst_8 = arith.constant dense<0.000000e+00> : vector<16x96xf32>
    %17 = tpu.matmul %15, %16, %cst_8 {dimension_numbers = #tpu.dot_dimension_numbers<[1], [0], [0], [1], [0, 0, 1, 1], [], []>} : vector<16x32xf32>, vector<32x96xf32>, vector<16x96xf32> -> vector<16x96xf32>
    %c0_9 = arith.constant 0 : index
    %c0_10 = arith.constant 0 : index
    %c0_11 = arith.constant 0 : index
    %18 = vector.load %arg4[%c0_9, %c0_10, %c0_11] : memref<4x8x8xf32, #tpu.memory_space<vmem>>, vector<4x8x8xf32>
    %19 = vector.extract_strided_slice %17 {offsets = [0, 0], sizes = [16, 8], strides = [1, 1]} : vector<16x96xf32> to vector<16x8xf32>
    %20 = vector.shape_cast %19 : vector<16x8xf32> to vector<2x8x8xf32>
    %21 = vector.extract_strided_slice %17 {offsets = [0, 32], sizes = [16, 8], strides = [1, 1]} : vector<16x96xf32> to vector<16x8xf32>
    %22 = vector.shape_cast %21 : vector<16x8xf32> to vector<2x8x8xf32>
    %23 = vector.extract_strided_slice %17 {offsets = [0, 64], sizes = [16, 8], strides = [1, 1]} : vector<16x96xf32> to vector<16x8xf32>
    %24 = vector.shape_cast %23 : vector<16x8xf32> to vector<2x8x8xf32>
    "tpu.trace_start"() <{level = 10 : i32, message = "bqd,bkd->bqk"}> : () -> ()
    %cst_12 = arith.constant dense<0.000000e+00> : vector<2x8x8xf32>
    %25 = tpu.matmul %20, %22, %cst_12 {dimension_numbers = #tpu.dot_dimension_numbers<[2], [2], [1], [1], [0, 0, 0, 1, 1, 1], [0], [0]>} : vector<2x8x8xf32>, vector<2x8x8xf32>, vector<2x8x8xf32> -> vector<2x8x8xf32>
    "tpu.trace_stop"() : () -> ()
    %26 = vector.extract_strided_slice %18 {offsets = [0, 0, 0], sizes = [1, 8, 8], strides = [1, 1, 1]} : vector<4x8x8xf32> to vector<1x8x8xf32>
    %27 = vector.shape_cast %26 : vector<1x8x8xf32> to vector<8x8xf32>
    %28 = vector.shape_cast %27 : vector<8x8xf32> to vector<1x8x8xf32>
    %29 = vector.broadcast %28 : vector<1x8x8xf32> to vector<2x8x8xf32>
    %30 = arith.addf %25, %29 : vector<2x8x8xf32>
    %cst_13 = arith.constant dense<0xFF800000> : vector<2x8xf32>
    %31 = vector.multi_reduction <maximumf>, %30, %cst_13 [2] : vector<2x8x8xf32> to vector<2x8xf32>
    %32 = vector.shape_cast %31 : vector<2x8xf32> to vector<2x8x1xf32>
    %33 = vector.broadcast %32 : vector<2x8x1xf32> to vector<2x8x8xf32>
    %34 = arith.subf %30, %33 : vector<2x8x8xf32>
    %35 = math.exp %34 : vector<2x8x8xf32>
    %cst_14 = arith.constant dense<0.000000e+00> : vector<2x8xf32>
    %36 = vector.multi_reduction <add>, %35, %cst_14 [2] : vector<2x8x8xf32> to vector<2x8xf32>
    %37 = vector.shape_cast %36 : vector<2x8xf32> to vector<2x8x1xf32>
    %38 = tpu.reciprocal %37 {approx = true} : vector<2x8x1xf32> -> vector<2x8x1xf32>
    %39 = arith.mulf %37, %38 : vector<2x8x1xf32>
    %cst_15 = arith.constant 2.000000e+00 : f32
    %40 = vector.broadcast %cst_15 : f32 to vector<2x8x1xf32>
    %41 = arith.subf %40, %39 : vector<2x8x1xf32>
    %42 = arith.mulf %38, %41 : vector<2x8x1xf32>
    %43 = vector.broadcast %42 : vector<2x8x1xf32> to vector<2x8x8xf32>
    %44 = arith.mulf %35, %43 : vector<2x8x8xf32>
    "tpu.trace_start"() <{level = 10 : i32, message = "bqk,bkd->bqd"}> : () -> ()
    %cst_16 = arith.constant dense<0.000000e+00> : vector<2x8x8xf32>
    %45 = tpu.matmul %44, %24, %cst_16 {dimension_numbers = #tpu.dot_dimension_numbers<[2], [1], [1], [2], [0, 0, 0, 1, 1, 2], [0], [0]>} : vector<2x8x8xf32>, vector<2x8x8xf32>, vector<2x8x8xf32> -> vector<2x8x8xf32>
    "tpu.trace_stop"() : () -> ()
    %46 = vector.extract_strided_slice %17 {offsets = [0, 8], sizes = [16, 8], strides = [1, 1]} : vector<16x96xf32> to vector<16x8xf32>
    %47 = vector.shape_cast %46 : vector<16x8xf32> to vector<2x8x8xf32>
    %48 = vector.extract_strided_slice %17 {offsets = [0, 40], sizes = [16, 8], strides = [1, 1]} : vector<16x96xf32> to vector<16x8xf32>
    %49 = vector.shape_cast %48 : vector<16x8xf32> to vector<2x8x8xf32>
    %50 = vector.extract_strided_slice %17 {offsets = [0, 72], sizes = [16, 8], strides = [1, 1]} : vector<16x96xf32> to vector<16x8xf32>
    %51 = vector.shape_cast %50 : vector<16x8xf32> to vector<2x8x8xf32>
    "tpu.trace_start"() <{level = 10 : i32, message = "bqd,bkd->bqk"}> : () -> ()
    %cst_17 = arith.constant dense<0.000000e+00> : vector<2x8x8xf32>
    %52 = tpu.matmul %47, %49, %cst_17 {dimension_numbers = #tpu.dot_dimension_numbers<[2], [2], [1], [1], [0, 0, 0, 1, 1, 1], [0], [0]>} : vector<2x8x8xf32>, vector<2x8x8xf32>, vector<2x8x8xf32> -> vector<2x8x8xf32>
    "tpu.trace_stop"() : () -> ()
    %53 = vector.extract_strided_slice %18 {offsets = [1, 0, 0], sizes = [1, 8, 8], strides = [1, 1, 1]} : vector<4x8x8xf32> to vector<1x8x8xf32>
    %54 = vector.shape_cast %53 : vector<1x8x8xf32> to vector<8x8xf32>
    %55 = vector.shape_cast %54 : vector<8x8xf32> to vector<1x8x8xf32>
    %56 = vector.broadcast %55 : vector<1x8x8xf32> to vector<2x8x8xf32>
    %57 = arith.addf %52, %56 : vector<2x8x8xf32>
    %cst_18 = arith.constant dense<0xFF800000> : vector<2x8xf32>
    %58 = vector.multi_reduction <maximumf>, %57, %cst_18 [2] : vector<2x8x8xf32> to vector<2x8xf32>
    %59 = vector.shape_cast %58 : vector<2x8xf32> to vector<2x8x1xf32>
    %60 = vector.broadcast %59 : vector<2x8x1xf32> to vector<2x8x8xf32>
    %61 = arith.subf %57, %60 : vector<2x8x8xf32>
    %62 = math.exp %61 : vector<2x8x8xf32>
    %cst_19 = arith.constant dense<0.000000e+00> : vector<2x8xf32>
    %63 = vector.multi_reduction <add>, %62, %cst_19 [2] : vector<2x8x8xf32> to vector<2x8xf32>
    %64 = vector.shape_cast %63 : vector<2x8xf32> to vector<2x8x1xf32>
    %65 = tpu.reciprocal %64 {approx = true} : vector<2x8x1xf32> -> vector<2x8x1xf32>
    %66 = arith.mulf %64, %65 : vector<2x8x1xf32>
    %cst_20 = arith.constant 2.000000e+00 : f32
    %67 = vector.broadcast %cst_20 : f32 to vector<2x8x1xf32>
    %68 = arith.subf %67, %66 : vector<2x8x1xf32>
    %69 = arith.mulf %65, %68 : vector<2x8x1xf32>
    %70 = vector.broadcast %69 : vector<2x8x1xf32> to vector<2x8x8xf32>
    %71 = arith.mulf %62, %70 : vector<2x8x8xf32>
    "tpu.trace_start"() <{level = 10 : i32, message = "bqk,bkd->bqd"}> : () -> ()
    %cst_21 = arith.constant dense<0.000000e+00> : vector<2x8x8xf32>
    %72 = tpu.matmul %71, %51, %cst_21 {dimension_numbers = #tpu.dot_dimension_numbers<[2], [1], [1], [2], [0, 0, 0, 1, 1, 2], [0], [0]>} : vector<2x8x8xf32>, vector<2x8x8xf32>, vector<2x8x8xf32> -> vector<2x8x8xf32>
    "tpu.trace_stop"() : () -> ()
    %73 = vector.extract_strided_slice %17 {offsets = [0, 16], sizes = [16, 8], strides = [1, 1]} : vector<16x96xf32> to vector<16x8xf32>
    %74 = vector.shape_cast %73 : vector<16x8xf32> to vector<2x8x8xf32>
    %75 = vector.extract_strided_slice %17 {offsets = [0, 48], sizes = [16, 8], strides = [1, 1]} : vector<16x96xf32> to vector<16x8xf32>
    %76 = vector.shape_cast %75 : vector<16x8xf32> to vector<2x8x8xf32>
    %77 = vector.extract_strided_slice %17 {offsets = [0, 80], sizes = [16, 8], strides = [1, 1]} : vector<16x96xf32> to vector<16x8xf32>
    %78 = vector.shape_cast %77 : vector<16x8xf32> to vector<2x8x8xf32>
    "tpu.trace_start"() <{level = 10 : i32, message = "bqd,bkd->bqk"}> : () -> ()
    %cst_22 = arith.constant dense<0.000000e+00> : vector<2x8x8xf32>
    %79 = tpu.matmul %74, %76, %cst_22 {dimension_numbers = #tpu.dot_dimension_numbers<[2], [2], [1], [1], [0, 0, 0, 1, 1, 1], [0], [0]>} : vector<2x8x8xf32>, vector<2x8x8xf32>, vector<2x8x8xf32> -> vector<2x8x8xf32>
    "tpu.trace_stop"() : () -> ()
    %80 = vector.extract_strided_slice %18 {offsets = [2, 0, 0], sizes = [1, 8, 8], strides = [1, 1, 1]} : vector<4x8x8xf32> to vector<1x8x8xf32>
    %81 = vector.shape_cast %80 : vector<1x8x8xf32> to vector<8x8xf32>
    %82 = vector.shape_cast %81 : vector<8x8xf32> to vector<1x8x8xf32>
    %83 = vector.broadcast %82 : vector<1x8x8xf32> to vector<2x8x8xf32>
    %84 = arith.addf %79, %83 : vector<2x8x8xf32>
    %cst_23 = arith.constant dense<0xFF800000> : vector<2x8xf32>
    %85 = vector.multi_reduction <maximumf>, %84, %cst_23 [2] : vector<2x8x8xf32> to vector<2x8xf32>
    %86 = vector.shape_cast %85 : vector<2x8xf32> to vector<2x8x1xf32>
    %87 = vector.broadcast %86 : vector<2x8x1xf32> to vector<2x8x8xf32>
    %88 = arith.subf %84, %87 : vector<2x8x8xf32>
    %89 = math.exp %88 : vector<2x8x8xf32>
    %cst_24 = arith.constant dense<0.000000e+00> : vector<2x8xf32>
    %90 = vector.multi_reduction <add>, %89, %cst_24 [2] : vector<2x8x8xf32> to vector<2x8xf32>
    %91 = vector.shape_cast %90 : vector<2x8xf32> to vector<2x8x1xf32>
    %92 = tpu.reciprocal %91 {approx = true} : vector<2x8x1xf32> -> vector<2x8x1xf32>
    %93 = arith.mulf %91, %92 : vector<2x8x1xf32>
    %cst_25 = arith.constant 2.000000e+00 : f32
    %94 = vector.broadcast %cst_25 : f32 to vector<2x8x1xf32>
    %95 = arith.subf %94, %93 : vector<2x8x1xf32>
    %96 = arith.mulf %92, %95 : vector<2x8x1xf32>
    %97 = vector.broadcast %96 : vector<2x8x1xf32> to vector<2x8x8xf32>
    %98 = arith.mulf %89, %97 : vector<2x8x8xf32>
    "tpu.trace_start"() <{level = 10 : i32, message = "bqk,bkd->bqd"}> : () -> ()
    %cst_26 = arith.constant dense<0.000000e+00> : vector<2x8x8xf32>
    %99 = tpu.matmul %98, %78, %cst_26 {dimension_numbers = #tpu.dot_dimension_numbers<[2], [1], [1], [2], [0, 0, 0, 1, 1, 2], [0], [0]>} : vector<2x8x8xf32>, vector<2x8x8xf32>, vector<2x8x8xf32> -> vector<2x8x8xf32>
    "tpu.trace_stop"() : () -> ()
    %100 = vector.extract_strided_slice %17 {offsets = [0, 24], sizes = [16, 8], strides = [1, 1]} : vector<16x96xf32> to vector<16x8xf32>
    %101 = vector.shape_cast %100 : vector<16x8xf32> to vector<2x8x8xf32>
    %102 = vector.extract_strided_slice %17 {offsets = [0, 56], sizes = [16, 8], strides = [1, 1]} : vector<16x96xf32> to vector<16x8xf32>
    %103 = vector.shape_cast %102 : vector<16x8xf32> to vector<2x8x8xf32>
    %104 = vector.extract_strided_slice %17 {offsets = [0, 88], sizes = [16, 8], strides = [1, 1]} : vector<16x96xf32> to vector<16x8xf32>
    %105 = vector.shape_cast %104 : vector<16x8xf32> to vector<2x8x8xf32>
    "tpu.trace_start"() <{level = 10 : i32, message = "bqd,bkd->bqk"}> : () -> ()
    %cst_27 = arith.constant dense<0.000000e+00> : vector<2x8x8xf32>
    %106 = tpu.matmul %101, %103, %cst_27 {dimension_numbers = #tpu.dot_dimension_numbers<[2], [2], [1], [1], [0, 0, 0, 1, 1, 1], [0], [0]>} : vector<2x8x8xf32>, vector<2x8x8xf32>, vector<2x8x8xf32> -> vector<2x8x8xf32>
    "tpu.trace_stop"() : () -> ()
    %107 = vector.extract_strided_slice %18 {offsets = [3, 0, 0], sizes = [1, 8, 8], strides = [1, 1, 1]} : vector<4x8x8xf32> to vector<1x8x8xf32>
    %108 = vector.shape_cast %107 : vector<1x8x8xf32> to vector<8x8xf32>
    %109 = vector.shape_cast %108 : vector<8x8xf32> to vector<1x8x8xf32>
    %110 = vector.broadcast %109 : vector<1x8x8xf32> to vector<2x8x8xf32>
    %111 = arith.addf %106, %110 : vector<2x8x8xf32>
    %cst_28 = arith.constant dense<0xFF800000> : vector<2x8xf32>
    %112 = vector.multi_reduction <maximumf>, %111, %cst_28 [2] : vector<2x8x8xf32> to vector<2x8xf32>
    %113 = vector.shape_cast %112 : vector<2x8xf32> to vector<2x8x1xf32>
    %114 = vector.broadcast %113 : vector<2x8x1xf32> to vector<2x8x8xf32>
    %115 = arith.subf %111, %114 : vector<2x8x8xf32>
    %116 = math.exp %115 : vector<2x8x8xf32>
    %cst_29 = arith.constant dense<0.000000e+00> : vector<2x8xf32>
    %117 = vector.multi_reduction <add>, %116, %cst_29 [2] : vector<2x8x8xf32> to vector<2x8xf32>
    %118 = vector.shape_cast %117 : vector<2x8xf32> to vector<2x8x1xf32>
    %119 = tpu.reciprocal %118 {approx = true} : vector<2x8x1xf32> -> vector<2x8x1xf32>
    %120 = arith.mulf %118, %119 : vector<2x8x1xf32>
    %cst_30 = arith.constant 2.000000e+00 : f32
    %121 = vector.broadcast %cst_30 : f32 to vector<2x8x1xf32>
    %122 = arith.subf %121, %120 : vector<2x8x1xf32>
    %123 = arith.mulf %119, %122 : vector<2x8x1xf32>
    %124 = vector.broadcast %123 : vector<2x8x1xf32> to vector<2x8x8xf32>
    %125 = arith.mulf %116, %124 : vector<2x8x8xf32>
    "tpu.trace_start"() <{level = 10 : i32, message = "bqk,bkd->bqd"}> : () -> ()
    %cst_31 = arith.constant dense<0.000000e+00> : vector<2x8x8xf32>
    %126 = tpu.matmul %125, %105, %cst_31 {dimension_numbers = #tpu.dot_dimension_numbers<[2], [1], [1], [2], [0, 0, 0, 1, 1, 2], [0], [0]>} : vector<2x8x8xf32>, vector<2x8x8xf32>, vector<2x8x8xf32> -> vector<2x8x8xf32>
    "tpu.trace_stop"() : () -> ()
    %127 = tpu.concatenate %45, %72, %99, %126 in 2 : vector<2x8x8xf32>, vector<2x8x8xf32>, vector<2x8x8xf32>, vector<2x8x8xf32> -> vector<2x8x32xf32>
    %128 = vector.shape_cast %127 : vector<2x8x32xf32> to vector<16x32xf32>
    %c0_32 = arith.constant 0 : index
    %c0_33 = arith.constant 0 : index
    %129 = vector.load %arg3[%c0_32, %c0_33] : memref<32x32xf32, #tpu.memory_space<vmem>>, vector<32x32xf32>
    %cst_34 = arith.constant dense<0.000000e+00> : vector<16x32xf32>
    %130 = tpu.matmul %128, %129, %cst_34 {dimension_numbers = #tpu.dot_dimension_numbers<[1], [0], [0], [1], [0, 0, 1, 1], [], []>} : vector<16x32xf32>, vector<32x32xf32>, vector<16x32xf32> -> vector<16x32xf32>
    %131 = vector.shape_cast %130 : vector<16x32xf32> to vector<2x8x32xf32>
    %132 = arith.addf %0, %131 : vector<2x8x32xf32>
    %c0_35 = arith.constant 0 : index
    %c0_36 = arith.constant 0 : index
    %c0_37 = arith.constant 0 : index
    %133 = vector.load %arg5[%c0_35, %c0_36, %c0_37] : memref<2x8x32xf32, #tpu.memory_space<vmem>>, vector<2x8x32xf32>
    tpu.vector_store %arg5[%c0_35, %c0_36, %c0_37], %132 {strides = array<i32>} : memref<2x8x32xf32, #tpu.memory_space<vmem>>, vector<2x8x32xf32>,
    return
  }
}

</mosaic_0001>

<llo_original>
// kernel: tpu_custom_call.1
$region0: #{tpu_custom_call.1}
  #allocation0 [shape = 'u32[]', space=smem, size = 0x4, offset = 0x4, fixed_abs, tag = 'smem constant byte address 0x4 - core index']
  #allocation1 [shape = 'u32[72,128]{1,0:T(1,128)}', space=vmem, size = 0x9000, scoped, tag = 'internal scratch']
  %s0 = inlined_call_operand.hbm [shape: f32[2,8,32], index: 0, kind: input, shape index: {}]
  %s1 = inlined_call_operand.hbm [shape: f32[1,32], index: 1, kind: input, shape index: {}]
  %s2 = inlined_call_operand.hbm [shape: f32[32,96], index: 2, kind: input, shape index: {}]
  %s3 = inlined_call_operand.hbm [shape: f32[32,32], index: 3, kind: input, shape index: {}]
  %s4 = inlined_call_operand.hbm [shape: f32[4,8,8], index: 4, kind: input, shape index: {}]
  %s5 = inlined_call_operand.hbm [shape: f32[2,8,32], index: 5, kind: output, shape index: {}]
  %s6 = sld [smem:[#allocation0]]
  $region50: #{tpu_custom_call.1} parent=0
    _
  %s8 = ssub.s32 1, %s6
  %s9 = scalar_select 0, %s8, %s6
  $region1: #{tpu_custom_call.1} parent=0
    #allocation2 [shape = 'u8[8192]{0}', space=vmem, size = 0x2000, scoped, tag = 'input window, operand 0, single buffered']
    #allocation3 [shape = 's32[1]{0}', space=sflag, size = 0x4, scoped, tag = 'scoped memory for tpu_custom_call.1']
    #allocation4 [shape = 's32[1]{0}', space=sflag, size = 0x4, scoped, tag = 'scoped memory for tpu_custom_call.1']
    #allocation5 [shape = 'u8[512]{0}', space=vmem, size = 0x400, scoped, tag = 'input window, operand 1, single buffered']
    #allocation6 [shape = 's32[1]{0}', space=sflag, size = 0x4, scoped, tag = 'scoped memory for tpu_custom_call.1']
    #allocation7 [shape = 'u8[16384]{0}', space=vmem, size = 0x4000, scoped, tag = 'input window, operand 2, single buffered']
    #allocation8 [shape = 'u8[16384]{0}', space=vmem, size = 0x4000, scoped, tag = 'input window, operand 3, single buffered']
    #allocation9 [shape = 's32[1]{0}', space=sflag, size = 0x4, scoped, tag = 'scoped memory for tpu_custom_call.1']
    #allocation10 [shape = 'u8[16384]{0}', space=vmem, size = 0x4000, scoped, tag = 'input window, operand 4, single buffered']
    #allocation11 [shape = 'u8[8192]{0}', space=vmem, size = 0x2000, scoped, tag = 'output window, operand 0, single buffered']
    %10 = vsyncpa [#allocation3], 0
    %11 = vsyncpa [#allocation6], 0
    %12 = vsyncpa [#allocation9], 0
    %13 = vsyncpa [#allocation4], 0
    // Predicated region
    $region2: #{tpu_custom_call.1} parent=1 // pred_check
      _
    $region3: #{tpu_custom_call.1} parent=1 // pred_check_branch
      %15 = sbr.rel (0) target = $region5
    $region4: #{tpu_custom_call.1} parent=1 // pred_region
      %17 = vsyncadd [#allocation3], 0
      %s18 = sshll.u32 %s0, 4
      %s19 = int_to_ptr.hbm [resolvable:$true] %s18
      %s20 = sshll.u32 [#allocation2], 4
      %s21 = int_to_ptr.vmem [resolvable:$true] %s20
      %26 = dma.hbm_to_vmem [thread:$0]  %s19, 256, %s21, [#allocation3], 128, 128, 8
    $region5: #{tpu_custom_call.1} parent=1 // pred_fallthru
      _
    // Predicated region
    $region6: #{tpu_custom_call.1} parent=1 // pred_check
      _
    $region7: #{tpu_custom_call.1} parent=1 // pred_check_branch
      %28 = sbr.rel (0) target = $region9
    $region8: #{tpu_custom_call.1} parent=1 // pred_region
      %30 = vsyncadd [#allocation6], 0
      %s32 = sshll.u32 %s1, 4
      %s33 = int_to_ptr.hbm [resolvable:$true] %s32
      %s34 = sshll.u32 [#allocation5], 4
      %s35 = int_to_ptr.vmem [resolvable:$true] %s34
      %37 = dma.hbm_to_vmem [thread:$0]  %s33, 16, %s35, [#allocation6]
    $region9: #{tpu_custom_call.1} parent=1 // pred_fallthru
      _
    // Predicated region
    $region10: #{tpu_custom_call.1} parent=1 // pred_check
      _
    $region11: #{tpu_custom_call.1} parent=1 // pred_check_branch
      %39 = sbr.rel (0) target = $region13
    $region12: #{tpu_custom_call.1} parent=1 // pred_region
      %41 = vsyncadd [#allocation6], 0
      %s42 = sshll.u32 %s2, 4
      %s43 = int_to_ptr.hbm [resolvable:$true] %s42
      %s44 = sshll.u32 [#allocation7], 4
      %s45 = int_to_ptr.vmem [resolvable:$true] %s44
      %50 = dma.hbm_to_vmem [thread:$0]  %s43, 512, %s45, [#allocation6], 128, 128, 8
    $region13: #{tpu_custom_call.1} parent=1 // pred_fallthru
      _
    // Predicated region
    $region14: #{tpu_custom_call.1} parent=1 // pred_check
      _
    $region15: #{tpu_custom_call.1} parent=1 // pred_check_branch
      %52 = sbr.rel (0) target = $region17
    $region16: #{tpu_custom_call.1} parent=1 // pred_region
      %54 = vsyncadd [#allocation9], 0
      %s55 = sshll.u32 %s3, 4
      %s56 = int_to_ptr.hbm [resolvable:$true] %s55
      %s57 = sshll.u32 [#allocation8], 4
      %s58 = int_to_ptr.vmem [resolvable:$true] %s57
      %63 = dma.hbm_to_vmem [thread:$0]  %s56, 512, %s58, [#allocation9], 128, 128, 8
    $region17: #{tpu_custom_call.1} parent=1 // pred_fallthru
      _
    // Predicated region
    $region18: #{tpu_custom_call.1} parent=1 // pred_check
      _
    $region19: #{tpu_custom_call.1} parent=1 // pred_check_branch
      %65 = sbr.rel (0) target = $region21
    $region20: #{tpu_custom_call.1} parent=1 // pred_region
      %67 = vsyncadd [#allocation9], 0
      %s68 = sshll.u32 %s4, 4
      %s69 = int_to_ptr.hbm [resolvable:$true] %s68
      %s70 = sshll.u32 [#allocation10], 4
      %s71 = int_to_ptr.vmem [resolvable:$true] %s70
      %76 = dma.hbm_to_vmem [thread:$0]  %s69, 512, %s71, [#allocation9], 128, 128, 8
    $region21: #{tpu_custom_call.1} parent=1 // pred_fallthru
      _
    // Predicated region
    $region22: #{tpu_custom_call.1} parent=1 // pred_check
      _
    $region23: #{tpu_custom_call.1} parent=1 // pred_check_branch
      %78 = sbr.rel (0) target = $region25
    $region24: #{tpu_custom_call.1} parent=1 // pred_region
      %80 = dma.done [#allocation3], 256
    $region25: #{tpu_custom_call.1} parent=1 // pred_fallthru
      _
    // Predicated region
    $region26: #{tpu_custom_call.1} parent=1 // pred_check
      _
    $region27: #{tpu_custom_call.1} parent=1 // pred_check_branch
      %82 = sbr.rel (0) target = $region29
    $region28: #{tpu_custom_call.1} parent=1 // pred_region
      %84 = dma.done [#allocation6], 16
    $region29: #{tpu_custom_call.1} parent=1 // pred_fallthru
      _
    // Predicated region
    $region30: #{tpu_custom_call.1} parent=1 // pred_check
      _
    $region31: #{tpu_custom_call.1} parent=1 // pred_check_branch
      %86 = sbr.rel (0) target = $region33
    $region32: #{tpu_custom_call.1} parent=1 // pred_region
      %88 = dma.done [#allocation6], 512
    $region33: #{tpu_custom_call.1} parent=1 // pred_fallthru
      _
    // Predicated region
    $region34: #{tpu_custom_call.1} parent=1 // pred_check
      _
    $region35: #{tpu_custom_call.1} parent=1 // pred_check_branch
      %90 = sbr.rel (0) target = $region37
    $region36: #{tpu_custom_call.1} parent=1 // pred_region
      %92 = dma.done [#allocation9], 512
    $region37: #{tpu_custom_call.1} parent=1 // pred_fallthru
      _
    // Predicated region
    $region38: #{tpu_custom_call.1} parent=1 // pred_check
      _
    $region39: #{tpu_custom_call.1} parent=1 // pred_check_branch
      %94 = sbr.rel (0) target = $region41
    $region40: #{tpu_custom_call.1} parent=1 // pred_region
      %96 = dma.done [#allocation9], 512
    $region41: #{tpu_custom_call.1} parent=1 // pred_fallthru
      _
    %v97 = vld [vmem:[#allocation2] sm:$0xff]
    %v98 = vld [vmem:[#allocation2 + $0x8] sm:$0xff]
    %v99 = vmul.f32 %v97, %v97
    %v100 = vmul.f32 %v98, %v98
    %vm101 = vcmask 261120
    %v102 = vsel %vm101, %v99, 0.0
    %103 = vadd.xlane.f32.xlu0 %v102
    %v104 = vpop.xlane.xlu0 %103
    %v105 = vsel %vm101, %v100, 0.0
    %106 = vadd.xlane.f32.xlu0 %v105
    %v107 = vpop.xlane.xlu0 %106
    %v108 = vrcp.pop 32.0
    %v109 = vmul.f32 32.0, %v108
    %v110 = vsub.f32 1.0, %v109
    %v111 = vmul.f32 %v108, %v110
    %v112 = vadd.f32 %v108, %v111
    %vm113 = vweird.f32 %v108
    %v114 = vsel %vm113, %v108, %v112
    %v115 = vmul.f32 %v104, %v114
    %v116 = vmul.f32 %v107, %v114
    %v117 = vadd.f32 %v115, 1e-06
    %v118 = vadd.f32 %v116, 1e-06
    %v119 = vrsqrt.pop %v117
    %v120 = vmul.f32 %v119, %v117
    %v121 = vmul.f32 %v120, %v119
    %v122 = vmul.f32 0.5, %v121
    %v123 = vsub.f32 1.5, %v122
    %v124 = vmul.f32 %v119, %v123
    %vm125 = vweird.f32 %v117
    %vm126 = vweird.f32 %v119
    %vm127 = vmor %vm125, %vm126
    %v128 = vsel %vm127, %v119, %v124
    %v129 = vrsqrt.pop %v118
    %v130 = vmul.f32 %v129, %v118
    %v131 = vmul.f32 %v130, %v129
    %v132 = vmul.f32 0.5, %v131
    %v133 = vsub.f32 1.5, %v132
    %v134 = vmul.f32 %v129, %v133
    %vm135 = vweird.f32 %v118
    %vm136 = vweird.f32 %v129
    %vm137 = vmor %vm135, %vm136
    %v138 = vsel %vm137, %v129, %v134
    %v139 = vmul.f32 %v97, %v128
    %v140 = vmul.f32 %v98, %v138
    %v141 = vld [vmem:[#allocation5] sm:$0x1]
    %v143 = vperm.slane %v141, 0
    %v145 = vmul.f32 %v139, %v143
    %v146 = vmul.f32 %v140, %v143
    %v147 = vld [vmem:[#allocation7] sm:$0xff]
    %v148 = vld [vmem:[#allocation7 + $0x8] sm:$0xff]
    %v149 = vld [vmem:[#allocation7 + $0x10] sm:$0xff]
    %v150 = vld [vmem:[#allocation7 + $0x18] sm:$0xff]
    %v152 = vsel %vm101, %v145, 0
    %v155 = vsel %vm101, %v146, 0
    %157 = vmatpush.msra.mxu0 0.0
    %158 = vmatpush.msra.mxu0 0.0
    %159 = vmatpush.msra.mxu0 0.0
    %160 = vmatpush.msra.mxu0 0.0
    %161 = vmatpush.msra.mxu0 0.0
    %162 = vmatpush.msra.mxu0 0.0
    %163 = vmatpush.msra.mxu0 0.0
    %164 = vmatpush.msra.mxu0 0.0
    %165 = vmatpush.msra.mxu0 0.0
    %166 = vmatpush.msra.mxu0 0.0
    %167 = vmatpush.msra.mxu0 0.0
    %168 = vmatpush.msra.mxu0 0.0
    %169 = vmatpush.msra.mxu0 %v150
    %170 = vmatpush.msra.mxu0 %v149
    %171 = vmatpush.msra.mxu0 %v148
    %172 = vmatpush.msra.mxu0 %v147
    %173 = vmatmul.f32.gmra.mxu0 %v152
    %v174 = vpop.f32.mrf.mxu0
    %v175 = vadd.f32 0.0, %v174
    %176 = vmatmul.f32.gmra.mxu0 %v155
    %v177 = vpop.f32.mrf.mxu0
    %v178 = vadd.f32 0.0, %v177
    %179 = vdwg.mxu0
    %v180 = vld [vmem:[#allocation10] sm:$0xff]
    %v181 = vld [vmem:[#allocation10 + $0x8] sm:$0xff]
    %v182 = vld [vmem:[#allocation10 + $0x10] sm:$0xff]
    %v183 = vld [vmem:[#allocation10 + $0x18] sm:$0xff]
    %185 = vrot.lane.b32.xlu0 %v175, 96
    %v186 = vpop.permute.xlu0 %185
    %vm187 = vcmask 64512
    %v188 = vsel %vm187, %v175, 0
    %v190 = vsel %vm187, %v186, 0
    %192 = vmatpush.xpose.msra.mxu0 0.0
    %193 = vmatpush.xpose.msra.mxu0 0.0
    %194 = vmatpush.xpose.msra.mxu0 0.0
    %195 = vmatpush.xpose.msra.mxu0 0.0
    %196 = vmatpush.xpose.msra.mxu0 0.0
    %197 = vmatpush.xpose.msra.mxu0 0.0
    %198 = vmatpush.xpose.msra.mxu0 0.0
    %199 = vmatpush.xpose.msra.mxu0 0.0
    %200 = vmatpush.xpose.msra.mxu0 0.0
    %201 = vmatpush.xpose.msra.mxu0 0.0
    %202 = vmatpush.xpose.msra.mxu0 0.0
    %203 = vmatpush.xpose.msra.mxu0 0.0
    %204 = vmatpush.xpose.msra.mxu0 0.0
    %205 = vmatpush.xpose.msra.mxu0 0.0
    %206 = vmatpush.xpose.msra.mxu0 0.0
    %207 = vmatpush.xpose.msra.mxu0 %v190
    %208 = vmatmul.f32.gmra.mxu0 %v188
    %v209 = vpop.f32.mrf.mxu0
    %v210 = vadd.f32 %v180, %v209
    %211 = vdwg.mxu0
    %213 = vrot.lane.b32.xlu0 %v178, 96
    %v214 = vpop.permute.xlu0 %213
    %v215 = vsel %vm187, %v178, 0
    %v217 = vsel %vm187, %v214, 0
    %219 = vmatpush.xpose.msra.mxu0 0.0
    %220 = vmatpush.xpose.msra.mxu0 0.0
    %221 = vmatpush.xpose.msra.mxu0 0.0
    %222 = vmatpush.xpose.msra.mxu0 0.0
    %223 = vmatpush.xpose.msra.mxu0 0.0
    %224 = vmatpush.xpose.msra.mxu0 0.0
    %225 = vmatpush.xpose.msra.mxu0 0.0
    %226 = vmatpush.xpose.msra.mxu0 0.0
    %227 = vmatpush.xpose.msra.mxu0 0.0
    %228 = vmatpush.xpose.msra.mxu0 0.0
    %229 = vmatpush.xpose.msra.mxu0 0.0
    %230 = vmatpush.xpose.msra.mxu0 0.0
    %231 = vmatpush.xpose.msra.mxu0 0.0
    %232 = vmatpush.xpose.msra.mxu0 0.0
    %233 = vmatpush.xpose.msra.mxu0 0.0
    %234 = vmatpush.xpose.msra.mxu0 %v217
    %235 = vmatmul.f32.gmra.mxu0 %v215
    %v236 = vpop.f32.mrf.mxu0
    %v237 = vadd.f32 %v180, %v236
    %238 = vdwg.mxu0
    %v239 = vsel %vm187, %v210, -inf
    %240 = vmax.xlane.f32.xlu0 %v239
    %v241 = vpop.xlane.xlu0 %240
    %v242 = vsel %vm187, %v237, -inf
    %243 = vmax.xlane.f32.xlu0 %v242
    %v244 = vpop.xlane.xlu0 %243
    %v245 = vsub.f32 %v210, %v241
    %v246 = vsub.f32 %v237, %v244
    %v247 = vmul.f32 %v245, 1.442695
    %v248 = vpow.pop %v247
    %v249 = vmul.f32 %v246, 1.442695
    %v250 = vpow.pop %v249
    %v251 = vsel %vm187, %v248, 0.0
    %252 = vadd.xlane.f32.xlu0 %v251
    %v253 = vpop.xlane.xlu0 %252
    %v254 = vsel %vm187, %v250, 0.0
    %255 = vadd.xlane.f32.xlu0 %v254
    %v256 = vpop.xlane.xlu0 %255
    %v257 = vrcp.pop %v253
    %v258 = vrcp.pop %v256
    %v259 = vmul.f32 %v253, %v257
    %v260 = vmul.f32 %v256, %v258
    %v261 = vsub.f32 2.0, %v259
    %v262 = vsub.f32 2.0, %v260
    %v263 = vmul.f32 %v257, %v261
    %v264 = vmul.f32 %v258, %v262
    %v265 = vmul.f32 %v248, %v263
    %v266 = vmul.f32 %v250, %v264
    %267 = vrot.lane.b32.xlu0 %v175, 64
    %v268 = vpop.permute.xlu0 %267
    %v271 = vsel %vm187, %v265, 0
    %273 = vmatpush.msra.mxu0 0.0
    %274 = vmatpush.msra.mxu0 0.0
    %275 = vmatpush.msra.mxu0 0.0
    %276 = vmatpush.msra.mxu0 0.0
    %277 = vmatpush.msra.mxu0 0.0
    %278 = vmatpush.msra.mxu0 0.0
    %279 = vmatpush.msra.mxu0 0.0
    %280 = vmatpush.msra.mxu0 0.0
    %281 = vmatpush.msra.mxu0 0.0
    %282 = vmatpush.msra.mxu0 0.0
    %283 = vmatpush.msra.mxu0 0.0
    %284 = vmatpush.msra.mxu0 0.0
    %285 = vmatpush.msra.mxu0 0.0
    %286 = vmatpush.msra.mxu0 0.0
    %287 = vmatpush.msra.mxu0 0.0
    %288 = vmatpush.msra.mxu0 %v268
    %289 = vmatmul.f32.gmra.mxu0 %v271
    %v290 = vpop.f32.mrf.mxu0
    %v291 = vadd.f32 0.0, %v290
    %292 = vdwg.mxu0
    %293 = vrot.lane.b32.xlu0 %v178, 64
    %v294 = vpop.permute.xlu0 %293
    %v297 = vsel %vm187, %v266, 0
    %299 = vmatpush.msra.mxu0 0.0
    %300 = vmatpush.msra.mxu0 0.0
    %301 = vmatpush.msra.mxu0 0.0
    %302 = vmatpush.msra.mxu0 0.0
    %303 = vmatpush.msra.mxu0 0.0
    %304 = vmatpush.msra.mxu0 0.0
    %305 = vmatpush.msra.mxu0 0.0
    %306 = vmatpush.msra.mxu0 0.0
    %307 = vmatpush.msra.mxu0 0.0
    %308 = vmatpush.msra.mxu0 0.0
    %309 = vmatpush.msra.mxu0 0.0
    %310 = vmatpush.msra.mxu0 0.0
    %311 = vmatpush.msra.mxu0 0.0
    %312 = vmatpush.msra.mxu0 0.0
    %313 = vmatpush.msra.mxu0 0.0
    %314 = vmatpush.msra.mxu0 %v294
    %315 = vmatmul.f32.gmra.mxu0 %v297
    %v316 = vpop.f32.mrf.mxu0
    %v317 = vadd.f32 0.0, %v316
    %318 = vdwg.mxu0
    %319 = vrot.lane.b32.xlu0 %v175, 120
    %v320 = vpop.permute.xlu0 %319
    %321 = vrot.lane.b32.xlu0 %v175, 88
    %v322 = vpop.permute.xlu0 %321
    %v323 = vsel %vm187, %v320, 0
    %v325 = vsel %vm187, %v322, 0
    %327 = vmatpush.xpose.msra.mxu0 0.0
    %328 = vmatpush.xpose.msra.mxu0 0.0
    %329 = vmatpush.xpose.msra.mxu0 0.0
    %330 = vmatpush.xpose.msra.mxu0 0.0
    %331 = vmatpush.xpose.msra.mxu0 0.0
    %332 = vmatpush.xpose.msra.mxu0 0.0
    %333 = vmatpush.xpose.msra.mxu0 0.0
    %334 = vmatpush.xpose.msra.mxu0 0.0
    %335 = vmatpush.xpose.msra.mxu0 0.0
    %336 = vmatpush.xpose.msra.mxu0 0.0
    %337 = vmatpush.xpose.msra.mxu0 0.0
    %338 = vmatpush.xpose.msra.mxu0 0.0
    %339 = vmatpush.xpose.msra.mxu0 0.0
    %340 = vmatpush.xpose.msra.mxu0 0.0
    %341 = vmatpush.xpose.msra.mxu0 0.0
    %342 = vmatpush.xpose.msra.mxu0 %v325
    %343 = vmatmul.f32.gmra.mxu0 %v323
    %v344 = vpop.f32.mrf.mxu0
    %v345 = vadd.f32 %v181, %v344
    %346 = vdwg.mxu0
    %347 = vrot.lane.b32.xlu0 %v178, 120
    %v348 = vpop.permute.xlu0 %347
    %349 = vrot.lane.b32.xlu0 %v178, 88
    %v350 = vpop.permute.xlu0 %349
    %v351 = vsel %vm187, %v348, 0
    %v353 = vsel %vm187, %v350, 0
    %355 = vmatpush.xpose.msra.mxu0 0.0
    %356 = vmatpush.xpose.msra.mxu0 0.0
    %357 = vmatpush.xpose.msra.mxu0 0.0
    %358 = vmatpush.xpose.msra.mxu0 0.0
    %359 = vmatpush.xpose.msra.mxu0 0.0
    %360 = vmatpush.xpose.msra.mxu0 0.0
    %361 = vmatpush.xpose.msra.mxu0 0.0
    %362 = vmatpush.xpose.msra.mxu0 0.0
    %363 = vmatpush.xpose.msra.mxu0 0.0
    %364 = vmatpush.xpose.msra.mxu0 0.0
    %365 = vmatpush.xpose.msra.mxu0 0.0
    %366 = vmatpush.xpose.msra.mxu0 0.0
    %367 = vmatpush.xpose.msra.mxu0 0.0
    %368 = vmatpush.xpose.msra.mxu0 0.0
    %369 = vmatpush.xpose.msra.mxu0 0.0
    %370 = vmatpush.xpose.msra.mxu0 %v353
    %371 = vmatmul.f32.gmra.mxu0 %v351
    %v372 = vpop.f32.mrf.mxu0
    %v373 = vadd.f32 %v181, %v372
    %374 = vdwg.mxu0
    %v375 = vsel %vm187, %v345, -inf
    %376 = vmax.xlane.f32.xlu0 %v375
    %v377 = vpop.xlane.xlu0 %376
    %v378 = vsel %vm187, %v373, -inf
    %379 = vmax.xlane.f32.xlu0 %v378
    %v380 = vpop.xlane.xlu0 %379
    %v381 = vsub.f32 %v345, %v377
    %v382 = vsub.f32 %v373, %v380
    %v383 = vmul.f32 %v381, 1.442695
    %v384 = vpow.pop %v383
    %v385 = vmul.f32 %v382, 1.442695
    %v386 = vpow.pop %v385
    %v387 = vsel %vm187, %v384, 0.0
    %388 = vadd.xlane.f32.xlu0 %v387
    %v389 = vpop.xlane.xlu0 %388
    %v390 = vsel %vm187, %v386, 0.0
    %391 = vadd.xlane.f32.xlu0 %v390
    %v392 = vpop.xlane.xlu0 %391
    %v393 = vrcp.pop %v389
    %v394 = vrcp.pop %v392
    %v395 = vmul.f32 %v389, %v393
    %v396 = vmul.f32 %v392, %v394
    %v397 = vsub.f32 2.0, %v395
    %v398 = vsub.f32 2.0, %v396
    %v399 = vmul.f32 %v393, %v397
    %v400 = vmul.f32 %v394, %v398
    %v401 = vmul.f32 %v384, %v399
    %v402 = vmul.f32 %v386, %v400
    %403 = vrot.lane.b32.xlu0 %v175, 56
    %v404 = vpop.permute.xlu0 %403
    %v407 = vsel %vm187, %v401, 0
    %409 = vmatpush.msra.mxu0 0.0
    %410 = vmatpush.msra.mxu0 0.0
    %411 = vmatpush.msra.mxu0 0.0
    %412 = vmatpush.msra.mxu0 0.0
    %413 = vmatpush.msra.mxu0 0.0
    %414 = vmatpush.msra.mxu0 0.0
    %415 = vmatpush.msra.mxu0 0.0
    %416 = vmatpush.msra.mxu0 0.0
    %417 = vmatpush.msra.mxu0 0.0
    %418 = vmatpush.msra.mxu0 0.0
    %419 = vmatpush.msra.mxu0 0.0
    %420 = vmatpush.msra.mxu0 0.0
    %421 = vmatpush.msra.mxu0 0.0
    %422 = vmatpush.msra.mxu0 0.0
    %423 = vmatpush.msra.mxu0 0.0
    %424 = vmatpush.msra.mxu0 %v404
    %425 = vmatmul.f32.gmra.mxu0 %v407
    %v426 = vpop.f32.mrf.mxu0
    %v427 = vadd.f32 0.0, %v426
    %428 = vdwg.mxu0
    %429 = vrot.lane.b32.xlu0 %v178, 56
    %v430 = vpop.permute.xlu0 %429
    %v433 = vsel %vm187, %v402, 0
    %435 = vmatpush.msra.mxu0 0.0
    %436 = vmatpush.msra.mxu0 0.0
    %437 = vmatpush.msra.mxu0 0.0
    %438 = vmatpush.msra.mxu0 0.0
    %439 = vmatpush.msra.mxu0 0.0
    %440 = vmatpush.msra.mxu0 0.0
    %441 = vmatpush.msra.mxu0 0.0
    %442 = vmatpush.msra.mxu0 0.0
    %443 = vmatpush.msra.mxu0 0.0
    %444 = vmatpush.msra.mxu0 0.0
    %445 = vmatpush.msra.mxu0 0.0
    %446 = vmatpush.msra.mxu0 0.0
    %447 = vmatpush.msra.mxu0 0.0
    %448 = vmatpush.msra.mxu0 0.0
    %449 = vmatpush.msra.mxu0 0.0
    %450 = vmatpush.msra.mxu0 %v430
    %451 = vmatmul.f32.gmra.mxu0 %v433
    %v452 = vpop.f32.mrf.mxu0
    %v453 = vadd.f32 0.0, %v452
    %454 = vdwg.mxu0
    %455 = vrot.lane.b32.xlu0 %v175, 112
    %v456 = vpop.permute.xlu0 %455
    %457 = vrot.lane.b32.xlu0 %v175, 80
    %v458 = vpop.permute.xlu0 %457
    %v459 = vsel %vm187, %v456, 0
    %v461 = vsel %vm187, %v458, 0
    %463 = vmatpush.xpose.msra.mxu0 0.0
    %464 = vmatpush.xpose.msra.mxu0 0.0
    %465 = vmatpush.xpose.msra.mxu0 0.0
    %466 = vmatpush.xpose.msra.mxu0 0.0
    %467 = vmatpush.xpose.msra.mxu0 0.0
    %468 = vmatpush.xpose.msra.mxu0 0.0
    %469 = vmatpush.xpose.msra.mxu0 0.0
    %470 = vmatpush.xpose.msra.mxu0 0.0
    %471 = vmatpush.xpose.msra.mxu0 0.0
    %472 = vmatpush.xpose.msra.mxu0 0.0
    %473 = vmatpush.xpose.msra.mxu0 0.0
    %474 = vmatpush.xpose.msra.mxu0 0.0
    %475 = vmatpush.xpose.msra.mxu0 0.0
    %476 = vmatpush.xpose.msra.mxu0 0.0
    %477 = vmatpush.xpose.msra.mxu0 0.0
    %478 = vmatpush.xpose.msra.mxu0 %v461
    %479 = vmatmul.f32.gmra.mxu0 %v459
    %v480 = vpop.f32.mrf.mxu0
    %v481 = vadd.f32 %v182, %v480
    %482 = vdwg.mxu0
    %483 = vrot.lane.b32.xlu0 %v178, 112
    %v484 = vpop.permute.xlu0 %483
    %485 = vrot.lane.b32.xlu0 %v178, 80
    %v486 = vpop.permute.xlu0 %485
    %v487 = vsel %vm187, %v484, 0
    %v489 = vsel %vm187, %v486, 0
    %491 = vmatpush.xpose.msra.mxu0 0.0
    %492 = vmatpush.xpose.msra.mxu0 0.0
    %493 = vmatpush.xpose.msra.mxu0 0.0
    %494 = vmatpush.xpose.msra.mxu0 0.0
    %495 = vmatpush.xpose.msra.mxu0 0.0
    %496 = vmatpush.xpose.msra.mxu0 0.0
    %497 = vmatpush.xpose.msra.mxu0 0.0
    %498 = vmatpush.xpose.msra.mxu0 0.0
    %499 = vmatpush.xpose.msra.mxu0 0.0
    %500 = vmatpush.xpose.msra.mxu0 0.0
    %501 = vmatpush.xpose.msra.mxu0 0.0
    %502 = vmatpush.xpose.msra.mxu0 0.0
    %503 = vmatpush.xpose.msra.mxu0 0.0
    %504 = vmatpush.xpose.msra.mxu0 0.0
    %505 = vmatpush.xpose.msra.mxu0 0.0
    %506 = vmatpush.xpose.msra.mxu0 %v489
    %507 = vmatmul.f32.gmra.mxu0 %v487
    %v508 = vpop.f32.mrf.mxu0
    %v509 = vadd.f32 %v182, %v508
    %510 = vdwg.mxu0
    %v511 = vsel %vm187, %v481, -inf
    %512 = vmax.xlane.f32.xlu0 %v511
    %v513 = vpop.xlane.xlu0 %512
    %v514 = vsel %vm187, %v509, -inf
    %515 = vmax.xlane.f32.xlu0 %v514
    %v516 = vpop.xlane.xlu0 %515
    %v517 = vsub.f32 %v481, %v513
    %v518 = vsub.f32 %v509, %v516
    %v519 = vmul.f32 %v517, 1.442695
    %v520 = vpow.pop %v519
    %v521 = vmul.f32 %v518, 1.442695
    %v522 = vpow.pop %v521
    %v523 = vsel %vm187, %v520, 0.0
    %524 = vadd.xlane.f32.xlu0 %v523
    %v525 = vpop.xlane.xlu0 %524
    %v526 = vsel %vm187, %v522, 0.0
    %527 = vadd.xlane.f32.xlu0 %v526
    %v528 = vpop.xlane.xlu0 %527
    %v529 = vrcp.pop %v525
    %v530 = vrcp.pop %v528
    %v531 = vmul.f32 %v525, %v529
    %v532 = vmul.f32 %v528, %v530
    %v533 = vsub.f32 2.0, %v531
    %v534 = vsub.f32 2.0, %v532
    %v535 = vmul.f32 %v529, %v533
    %v536 = vmul.f32 %v530, %v534
    %v537 = vmul.f32 %v520, %v535
    %v538 = vmul.f32 %v522, %v536
    %539 = vrot.lane.b32.xlu0 %v175, 48
    %v540 = vpop.permute.xlu0 %539
    %v543 = vsel %vm187, %v537, 0
    %545 = vmatpush.msra.mxu0 0.0
    %546 = vmatpush.msra.mxu0 0.0
    %547 = vmatpush.msra.mxu0 0.0
    %548 = vmatpush.msra.mxu0 0.0
    %549 = vmatpush.msra.mxu0 0.0
    %550 = vmatpush.msra.mxu0 0.0
    %551 = vmatpush.msra.mxu0 0.0
    %552 = vmatpush.msra.mxu0 0.0
    %553 = vmatpush.msra.mxu0 0.0
    %554 = vmatpush.msra.mxu0 0.0
    %555 = vmatpush.msra.mxu0 0.0
    %556 = vmatpush.msra.mxu0 0.0
    %557 = vmatpush.msra.mxu0 0.0
    %558 = vmatpush.msra.mxu0 0.0
    %559 = vmatpush.msra.mxu0 0.0
    %560 = vmatpush.msra.mxu0 %v540
    %561 = vmatmul.f32.gmra.mxu0 %v543
    %v562 = vpop.f32.mrf.mxu0
    %v563 = vadd.f32 0.0, %v562
    %564 = vdwg.mxu0
    %565 = vrot.lane.b32.xlu0 %v178, 48
    %v566 = vpop.permute.xlu0 %565
    %v569 = vsel %vm187, %v538, 0
    %571 = vmatpush.msra.mxu0 0.0
    %572 = vmatpush.msra.mxu0 0.0
    %573 = vmatpush.msra.mxu0 0.0
    %574 = vmatpush.msra.mxu0 0.0
    %575 = vmatpush.msra.mxu0 0.0
    %576 = vmatpush.msra.mxu0 0.0
    %577 = vmatpush.msra.mxu0 0.0
    %578 = vmatpush.msra.mxu0 0.0
    %579 = vmatpush.msra.mxu0 0.0
    %580 = vmatpush.msra.mxu0 0.0
    %581 = vmatpush.msra.mxu0 0.0
    %582 = vmatpush.msra.mxu0 0.0
    %583 = vmatpush.msra.mxu0 0.0
    %584 = vmatpush.msra.mxu0 0.0
    %585 = vmatpush.msra.mxu0 0.0
    %586 = vmatpush.msra.mxu0 %v566
    %587 = vmatmul.f32.gmra.mxu0 %v569
    %v588 = vpop.f32.mrf.mxu0
    %v589 = vadd.f32 0.0, %v588
    %590 = vdwg.mxu0
    %591 = vrot.lane.b32.xlu0 %v175, 104
    %v592 = vpop.permute.xlu0 %591
    %593 = vrot.lane.b32.xlu0 %v175, 72
    %v594 = vpop.permute.xlu0 %593
    %v595 = vsel %vm187, %v592, 0
    %v597 = vsel %vm187, %v594, 0
    %599 = vmatpush.xpose.msra.mxu0 0.0
    %600 = vmatpush.xpose.msra.mxu0 0.0
    %601 = vmatpush.xpose.msra.mxu0 0.0
    %602 = vmatpush.xpose.msra.mxu0 0.0
    %603 = vmatpush.xpose.msra.mxu0 0.0
    %604 = vmatpush.xpose.msra.mxu0 0.0
    %605 = vmatpush.xpose.msra.mxu0 0.0
    %606 = vmatpush.xpose.msra.mxu0 0.0
    %607 = vmatpush.xpose.msra.mxu0 0.0
    %608 = vmatpush.xpose.msra.mxu0 0.0
    %609 = vmatpush.xpose.msra.mxu0 0.0
    %610 = vmatpush.xpose.msra.mxu0 0.0
    %611 = vmatpush.xpose.msra.mxu0 0.0
    %612 = vmatpush.xpose.msra.mxu0 0.0
    %613 = vmatpush.xpose.msra.mxu0 0.0
    %614 = vmatpush.xpose.msra.mxu0 %v597
    %615 = vmatmul.f32.gmra.mxu0 %v595
    %v616 = vpop.f32.mrf.mxu0
    %v617 = vadd.f32 %v183, %v616
    %618 = vdwg.mxu0
    %619 = vrot.lane.b32.xlu0 %v178, 104
    %v620 = vpop.permute.xlu0 %619
    %621 = vrot.lane.b32.xlu0 %v178, 72
    %v622 = vpop.permute.xlu0 %621
    %v623 = vsel %vm187, %v620, 0
    %v625 = vsel %vm187, %v622, 0
    %627 = vmatpush.xpose.msra.mxu0 0.0
    %628 = vmatpush.xpose.msra.mxu0 0.0
    %629 = vmatpush.xpose.msra.mxu0 0.0
    %630 = vmatpush.xpose.msra.mxu0 0.0
    %631 = vmatpush.xpose.msra.mxu0 0.0
    %632 = vmatpush.xpose.msra.mxu0 0.0
    %633 = vmatpush.xpose.msra.mxu0 0.0
    %634 = vmatpush.xpose.msra.mxu0 0.0
    %635 = vmatpush.xpose.msra.mxu0 0.0
    %636 = vmatpush.xpose.msra.mxu0 0.0
    %637 = vmatpush.xpose.msra.mxu0 0.0
    %638 = vmatpush.xpose.msra.mxu0 0.0
    %639 = vmatpush.xpose.msra.mxu0 0.0
    %640 = vmatpush.xpose.msra.mxu0 0.0
    %641 = vmatpush.xpose.msra.mxu0 0.0
    %642 = vmatpush.xpose.msra.mxu0 %v625
    %643 = vmatmul.f32.gmra.mxu0 %v623
    %v644 = vpop.f32.mrf.mxu0
    %v645 = vadd.f32 %v183, %v644
    %646 = vdwg.mxu0
    %v647 = vsel %vm187, %v617, -inf
    %648 = vmax.xlane.f32.xlu0 %v647
    %v649 = vpop.xlane.xlu0 %648
    %v650 = vsel %vm187, %v645, -inf
    %651 = vmax.xlane.f32.xlu0 %v650
    %v652 = vpop.xlane.xlu0 %651
    %v653 = vsub.f32 %v617, %v649
    %v654 = vsub.f32 %v645, %v652
    %v655 = vmul.f32 %v653, 1.442695
    %v656 = vpow.pop %v655
    %v657 = vmul.f32 %v654, 1.442695
    %v658 = vpow.pop %v657
    %v659 = vsel %vm187, %v656, 0.0
    %660 = vadd.xlane.f32.xlu0 %v659
    %v661 = vpop.xlane.xlu0 %660
    %v662 = vsel %vm187, %v658, 0.0
    %663 = vadd.xlane.f32.xlu0 %v662
    %v664 = vpop.xlane.xlu0 %663
    %v665 = vrcp.pop %v661
    %v666 = vrcp.pop %v664
    %v667 = vmul.f32 %v661, %v665
    %v668 = vmul.f32 %v664, %v666
    %v669 = vsub.f32 2.0, %v667
    %v670 = vsub.f32 2.0, %v668
    %v671 = vmul.f32 %v665, %v669
    %v672 = vmul.f32 %v666, %v670
    %v673 = vmul.f32 %v656, %v671
    %v674 = vmul.f32 %v658, %v672
    %675 = vrot.lane.b32.xlu0 %v175, 40
    %v676 = vpop.permute.xlu0 %675
    %v679 = vsel %vm187, %v673, 0
    %681 = vmatpush.msra.mxu0 0.0
    %682 = vmatpush.msra.mxu0 0.0
    %683 = vmatpush.msra.mxu0 0.0
    %684 = vmatpush.msra.mxu0 0.0
    %685 = vmatpush.msra.mxu0 0.0
    %686 = vmatpush.msra.mxu0 0.0
    %687 = vmatpush.msra.mxu0 0.0
    %688 = vmatpush.msra.mxu0 0.0
    %689 = vmatpush.msra.mxu0 0.0
    %690 = vmatpush.msra.mxu0 0.0
    %691 = vmatpush.msra.mxu0 0.0
    %692 = vmatpush.msra.mxu0 0.0
    %693 = vmatpush.msra.mxu0 0.0
    %694 = vmatpush.msra.mxu0 0.0
    %695 = vmatpush.msra.mxu0 0.0
    %696 = vmatpush.msra.mxu0 %v676
    %697 = vmatmul.f32.gmra.mxu0 %v679
    %v698 = vpop.f32.mrf.mxu0
    %v699 = vadd.f32 0.0, %v698
    %700 = vdwg.mxu0
    %701 = vrot.lane.b32.xlu0 %v178, 40
    %v702 = vpop.permute.xlu0 %701
    %v705 = vsel %vm187, %v674, 0
    %707 = vmatpush.msra.mxu0 0.0
    %708 = vmatpush.msra.mxu0 0.0
    %709 = vmatpush.msra.mxu0 0.0
    %710 = vmatpush.msra.mxu0 0.0
    %711 = vmatpush.msra.mxu0 0.0
    %712 = vmatpush.msra.mxu0 0.0
    %713 = vmatpush.msra.mxu0 0.0
    %714 = vmatpush.msra.mxu0 0.0
    %715 = vmatpush.msra.mxu0 0.0
    %716 = vmatpush.msra.mxu0 0.0
    %717 = vmatpush.msra.mxu0 0.0
    %718 = vmatpush.msra.mxu0 0.0
    %719 = vmatpush.msra.mxu0 0.0
    %720 = vmatpush.msra.mxu0 0.0
    %721 = vmatpush.msra.mxu0 0.0
    %722 = vmatpush.msra.mxu0 %v702
    %723 = vmatmul.f32.gmra.mxu0 %v705
    %v724 = vpop.f32.mrf.mxu0
    %v725 = vadd.f32 0.0, %v724
    %726 = vdwg.mxu0
    %729 = vrot.lane.b32.xlu0 %v427, 8
    %v730 = vpop.permute.xlu0 %729
    %731 = vrot.lane.b32.xlu0 %v453, 8
    %v732 = vpop.permute.xlu0 %731
    %737 = vrot.lane.b32.xlu0 %v563, 16
    %v738 = vpop.permute.xlu0 %737
    %739 = vrot.lane.b32.xlu0 %v589, 16
    %v740 = vpop.permute.xlu0 %739
    %745 = vrot.lane.b32.xlu0 %v699, 24
    %v746 = vpop.permute.xlu0 %745
    %747 = vrot.lane.b32.xlu0 %v725, 24
    %v748 = vpop.permute.xlu0 %747
    %v751 = vsel %vm187, %v291, %v730
    %v752 = vsel %vm187, %v317, %v732
    %vm753 = vcmask 130048
    %v754 = vsel %vm753, %v751, %v738
    %v755 = vsel %vm753, %v752, %v740
    %vm756 = vcmask 195584
    %v757 = vsel %vm756, %v754, %v746
    %v758 = vsel %vm756, %v755, %v748
    %v759 = vld [vmem:[#allocation8] sm:$0xff]
    %v760 = vld [vmem:[#allocation8 + $0x8] sm:$0xff]
    %v761 = vld [vmem:[#allocation8 + $0x10] sm:$0xff]
    %v762 = vld [vmem:[#allocation8 + $0x18] sm:$0xff]
    %v764 = vsel %vm101, %v757, 0
    %v767 = vsel %vm101, %v758, 0
    %769 = vmatpush.msra.mxu0 0.0
    %770 = vmatpush.msra.mxu0 0.0
    %771 = vmatpush.msra.mxu0 0.0
    %772 = vmatpush.msra.mxu0 0.0
    %773 = vmatpush.msra.mxu0 0.0
    %774 = vmatpush.msra.mxu0 0.0
    %775 = vmatpush.msra.mxu0 0.0
    %776 = vmatpush.msra.mxu0 0.0
    %777 = vmatpush.msra.mxu0 0.0
    %778 = vmatpush.msra.mxu0 0.0
    %779 = vmatpush.msra.mxu0 0.0
    %780 = vmatpush.msra.mxu0 0.0
    %781 = vmatpush.msra.mxu0 %v762
    %782 = vmatpush.msra.mxu0 %v761
    %783 = vmatpush.msra.mxu0 %v760
    %784 = vmatpush.msra.mxu0 %v759
    %785 = vmatmul.f32.gmra.mxu0 %v764
    %v786 = vpop.f32.mrf.mxu0
    %v787 = vadd.f32 0.0, %v786
    %788 = vmatmul.f32.gmra.mxu0 %v767
    %v789 = vpop.f32.mrf.mxu0
    %v790 = vadd.f32 0.0, %v789
    %791 = vdwg.mxu0
    %v792 = vadd.f32 %v97, %v787
    %v793 = vadd.f32 %v98, %v790
    %794 = vst.msk [vmem:[#allocation11] sm:$0xff] %vm101, %v792
    %795 = vst.msk [vmem:[#allocation11 + $0x8] sm:$0xff] %vm101, %v793
    // Predicated region
    $region42: #{tpu_custom_call.1} parent=1 // pred_check
      _
    $region43: #{tpu_custom_call.1} parent=1 // pred_check_branch
      %797 = sbr.rel (0) target = $region45
    $region44: #{tpu_custom_call.1} parent=1 // pred_region
      %799 = vsyncadd [#allocation4], 0
      %s800 = sshll.u32 [#allocation11], 4
      %s801 = int_to_ptr.vmem [resolvable:$true] %s800
      %s802 = sshll.u32 %s5, 4
      %s803 = int_to_ptr.hbm [resolvable:$true] %s802
      %808 = dma.vmem_to_hbm [thread:$0]  %s801, 256, %s803, [#allocation4], 128, 128, 8
    $region45: #{tpu_custom_call.1} parent=1 // pred_fallthru
      _
    // Predicated region
    $region46: #{tpu_custom_call.1} parent=1 // pred_check
      _
    $region47: #{tpu_custom_call.1} parent=1 // pred_check_branch
      %810 = sbr.rel (0) target = $region49
    $region48: #{tpu_custom_call.1} parent=1 // pred_region
      %812 = dma.done [#allocation4], 256
    $region49: #{tpu_custom_call.1} parent=1 // pred_fallthru
      _
    %813 = vsyncpa [#allocation3], 1
    %814 = vsyncpa [#allocation6], 1
    %815 = vsyncpa [#allocation9], 1
    %816 = vsyncpa [#allocation4], 1

</llo_original>
